<compile_context>
chip_gen: v5e
topology: v5e:2x2
jax: 0.10.0
libtpu: 0.0.40
codegen_flags: <defaults>
</compile_context>

<pallas_src>
import jax
import jax.numpy as jnp
from jax.experimental import pallas as pl
from jax.experimental.pallas import tpu as pltpu


def _round_up(x, m):
    return (x + m - 1) // m * m


# ---------------------------------------------------------------------------
# pltpu.roll rotation-convention probe (cached).
# We need rolled[:, p] == src[:, (p + s) % L].  With jnp.roll semantics that
# is shift = -s; a tiny probe kernel removes any ambiguity in the hardware
# primitive's sign convention.
# ---------------------------------------------------------------------------
_ROLL_SIGN = None


def _probe_roll_sign():
    def k(x_ref, o_ref):
        o_ref[...] = pltpu.roll(x_ref[...], 3, 1)

    x = jnp.tile(jnp.arange(256, dtype=jnp.float32)[None, :], (8, 1))
    y = pl.pallas_call(
        k, out_shape=jax.ShapeDtypeStruct((8, 256), jnp.float32))(x)
    if bool(jnp.allclose(y, jnp.roll(x, 3, axis=1))):
        return 1          # matches jnp.roll convention
    if bool(jnp.allclose(y, jnp.roll(x, -3, axis=1))):
        return -1         # opposite convention
    raise RuntimeError("unexpected pltpu.roll semantics")


# ---------------------------------------------------------------------------
# Fused kernel: 3 x (3x3x3 conv + BN(eval) + PReLU), one batch element / step.
# ---------------------------------------------------------------------------
def _make_fused_kernel(H, W, L, roll_sign):
    Hp, Wp = H + 2, W + 2
    plane = Hp * Wp
    # Lane shift of each tap relative to the (padded, flattened) output voxel.
    tap_shifts = [(kd - 1) * plane + (kh - 1) * Wp + (kw - 1)
                  for kd in range(3) for kh in range(3) for kw in range(3)]

    def kernel(x_ref, w1_ref, w2_ref, w3_ref, p_ref, mask_ref, o_ref,
               act1_ref, act2_ref, patch_ref):
        mask = mask_ref[...]       # (1, L)  1.0 at interior (real) voxels
        prm = p_ref[...]           # (3, 3, Cout_p, 1): [layer, {scale,shift,alpha}]

        def conv_bn_prelu(src, w_ref, li):
            # src: (C, L) zero-padded, lane-flattened activation (value).
            C = src.shape[0]
            # im2col: 27 lane-rotated copies stacked along the contraction
            # axis (rows are 8-sublane aligned -> cheap, no reshape copies).
            for t, s in enumerate(tap_shifts):
                sh = (roll_sign * -s) % L
                piece = src if sh == 0 else pltpu.roll(src, sh, 1)
                patch_ref[t * C:(t + 1) * C, :] = piece
            # One MXU matmul per layer: (Cout, 27*C) x (27*C, L) -> (Cout, L).
            acc = jnp.dot(w_ref[...], patch_ref[:27 * C, :],
                          preferred_element_type=jnp.float32)
            scale, shift, alpha = prm[li, 0], prm[li, 1], prm[li, 2]  # (Cout,1)
            y = acc * scale + shift                # conv bias + BatchNorm (eval)
            y = jnp.where(y > 0.0, y, alpha * y)   # PReLU (Dropout = identity)
            return y * mask                        # re-zero halo -> next layer pad

        act1_ref[...] = conv_bn_prelu(x_ref[0], w1_ref, 0)
        act2_ref[...] = conv_bn_prelu(act1_ref[...], w2_ref, 1)
        o_ref[0] = conv_bn_prelu(act2_ref[...], w3_ref, 2).astype(o_ref.dtype)

    return kernel


# ---------------------------------------------------------------------------
# Host-side packing helpers (cheap XLA layout plumbing).
# ---------------------------------------------------------------------------
def _pack_weight(w, cin_p, cout_p):
    """DHWIO (3,3,3,Cin,Cout) -> (Cout_p, 27*Cin_p), tap-major / channel-minor."""
    cin, cout = w.shape[3], w.shape[4]
    w_p = jnp.pad(w, ((0, 0), (0, 0), (0, 0),
                      (0, cin_p - cin), (0, cout_p - cout)))
    return jnp.transpose(w_p.reshape(27 * cin_p, cout_p))


def _pack_params(b, scale, shift, alpha, cout_p):
    """Fold conv bias into the BN shift; pack [scale, shift', alpha] rows."""
    cout = scale.shape[0]
    scale_p = jnp.ones((cout_p,), jnp.float32).at[:cout].set(scale)
    shift_p = jnp.zeros((cout_p,), jnp.float32).at[:cout].set(shift + b * scale)
    alpha_p = jnp.zeros((cout_p,), jnp.float32).at[:cout].set(
        jnp.broadcast_to(jnp.asarray(alpha, jnp.float32), (cout,)))
    return jnp.stack([scale_p, shift_p, alpha_p], axis=0)      # (3, Cout_p)


def conv_block(x_ncdhw, params):
    """Full Conv module forward: (N, C_in, D, H, W) -> (N, C_out, D, H, W)."""
    global _ROLL_SIGN
    if _ROLL_SIGN is None:
        _ROLL_SIGN = _probe_roll_sign()

    N, Cin, D, H, W = x_ncdhw.shape
    Cout = params[0][0].shape[-1]
    Dp, Hp, Wp = D + 2, H + 2, W + 2
    Ls = Dp * Hp * Wp                  # real flattened padded volume (1000)
    L = _round_up(Ls, 128)             # lane dim rounded to full vregs (1024)
    Cin_p = _round_up(Cin, 8)          # sublane-aligned channel counts
    Cout_p = _round_up(Cout, 8)

    # Padded + channel-padded + lane-flattened input (zeros in the halo).
    xp = jnp.pad(x_ncdhw.astype(jnp.float32),
                 ((0, 0), (0, Cin_p - Cin), (1, 1), (1, 1), (1, 1)))
    x_flat = jnp.pad(xp.reshape(N, Cin_p, Ls), ((0, 0), (0, 0), (0, L - Ls)))

    # Interior mask: 1.0 at real voxels, 0.0 at halo / tail padding.
    interior = jnp.zeros((Dp, Hp, Wp), jnp.float32)
    interior = interior.at[1:1 + D, 1:1 + H, 1:1 + W].set(1.0)
    mask = jnp.pad(interior.reshape(1, Ls), ((0, 0), (0, L - Ls)))

    (w1, b1, s1, t1, a1), (w2, b2, s2, t2, a2), (w3, b3, s3, t3, a3) = params
    wf1 = _pack_weight(w1, Cin_p, Cout_p)
    wf2 = _pack_weight(w2, Cout_p, Cout_p)
    wf3 = _pack_weight(w3, Cout_p, Cout_p)
    prm = jnp.stack([_pack_params(b1, s1, t1, a1, Cout_p),
                     _pack_params(b2, s2, t2, a2, Cout_p),
                     _pack_params(b3, s3, t3, a3, Cout_p)],
                    axis=0).reshape(3, 3, Cout_p, 1)

    kernel = _make_fused_kernel(H, W, L, _ROLL_SIGN)
    cmax = max(Cin_p, Cout_p)

    out_flat = pl.pallas_call(
        kernel,
        out_shape=jax.ShapeDtypeStruct((N, Cout_p, L), jnp.float32),
        grid=(N,),
        in_specs=[
            pl.BlockSpec((1, Cin_p, L), lambda n: (n, 0, 0)),
            pl.BlockSpec((Cout_p, 27 * Cin_p), lambda n: (0, 0)),
            pl.BlockSpec((Cout_p, 27 * Cout_p), lambda n: (0, 0)),
            pl.BlockSpec((Cout_p, 27 * Cout_p), lambda n: (0, 0)),
            pl.BlockSpec((3, 3, Cout_p, 1), lambda n: (0, 0, 0, 0)),
            pl.BlockSpec((1, L), lambda n: (0, 0)),
        ],
        out_specs=pl.BlockSpec((1, Cout_p, L), lambda n: (n, 0, 0)),
        scratch_shapes=[
            pltpu.VMEM((Cout_p, L), jnp.float32),      # layer-1 activation
            pltpu.VMEM((Cout_p, L), jnp.float32),      # layer-2 activation
            pltpu.VMEM((27 * cmax, L), jnp.float32),   # im2col patch buffer
        ],
        compiler_params=pltpu.CompilerParams(
            dimension_semantics=("parallel",)),
    )(x_flat, wf1, wf2, wf3, prm, mask)

    out = out_flat[:, :Cout, :Ls].reshape(N, Cout, Dp, Hp, Wp)
    return out[:, :, 1:1 + D, 1:1 + H, 1:1 + W]   # drop halo -> NCDHW


# ---------------------------------------------------------------------------
# Parameters + pure-JAX reference (correctness check).
# ---------------------------------------------------------------------------
def init_conv_block_params(key, C_in, C_out):
    """Deterministic parameter init mirroring the PyTorch module's shapes."""
    eps = 1e-5
    layers = []
    cins = [C_in, C_out, C_out]
    keys = jax.random.split(key, 2 * len(cins))
    for i, cin in enumerate(cins):
        fan_in = cin * 3 * 3 * 3
        bound = 1.0 / (fan_in ** 0.5)
        w = jax.random.uniform(keys[2 * i], (3, 3, 3, cin, C_out),
                               jnp.float32, -bound, bound)
        b = jax.random.uniform(keys[2 * i + 1], (C_out,),
                               jnp.float32, -bound, bound)
        # BatchNorm3d fresh init: gamma=1, beta=0, running_mean=0, running_var=1
        gamma = jnp.ones((C_out,), jnp.float32)
        beta = jnp.zeros((C_out,), jnp.float32)
        rmean = jnp.zeros((C_out,), jnp.float32)
        rvar = jnp.ones((C_out,), jnp.float32)
        scale = gamma / jnp.sqrt(rvar + eps)
        shift = beta - rmean * scale
        alpha = jnp.float32(0.25)  # nn.PReLU() default: one shared slope 0.25
        layers.append((w, b, scale, shift, alpha))
    return layers


def _reference_block(x_ncdhw, params):
    """Pure-JAX reference (XLA conv, full f32 precision)."""
    x = jnp.transpose(x_ncdhw, (0, 2, 3, 4, 1))
    for (w, b, scale, shift, alpha) in params:
        y = jax.lax.conv_general_dilated(
            x, w, window_strides=(1, 1, 1),
            padding=((1, 1), (1, 1), (1, 1)),
            dimension_numbers=("NDHWC", "DHWIO", "NDHWC"),
            precision=jax.lax.Precision.HIGHEST)
        y = y + b
        y = y * scale + shift
        x = jnp.where(y > 0, y, alpha * y)
    return jnp.transpose(x, (0, 4, 1, 2, 3))


if __name__ == "__main__":
    key = jax.random.PRNGKey(0)
    kx, kp = jax.random.split(key)

    N, C_in, C_out, D, H, W = 2, 4, 8, 8, 8, 8
    x = jax.random.normal(kx, (N, C_in, D, H, W), jnp.float32)
    params = init_conv_block_params(kp, C_in, C_out)

    y = conv_block(x, params)
    jax.block_until_ready(y)

    y_ref = _reference_block(x, params)
    assert y.shape == (N, C_out, D, H, W)
    # Loose-ish tolerance: allows for MXU f32 precision-path differences
    # between the Pallas matmul and XLA's convolution; structural bugs would
    # produce O(1) errors and still be caught.
    assert jnp.allclose(y, y_ref, atol=1e-2, rtol=1e-2), \
        "mismatch vs XLA reference"

    print("KERNEL_OK")
</pallas_src>

<mosaic_0001>
module attributes {stable_mosaic.version = 11 : i64} {
  func.func @k(%arg0: memref<8x256xf32, #tpu.memory_space<vmem>>, %arg1: memref<8x256xf32, #tpu.memory_space<vmem>>) attributes {dimension_semantics = [], scalar_prefetch = 0 : i64, scratch_operands = 0 : i64, tpu.core_type = #tpu.core_type<tc>} {
    %c0 = arith.constant 0 : index
    %c0_0 = arith.constant 0 : index
    %0 = vector.load %arg0[%c0, %c0_0] : memref<8x256xf32, #tpu.memory_space<vmem>>, vector<8x256xf32>
    %c3_i32 = arith.constant 3 : i32
    %1 = tpu.dynamic_rotate %0 by %c3_i32 dim 1 : vector<8x256xf32>, i32 -> vector<8x256xf32>
    %c0_1 = arith.constant 0 : index
    %c0_2 = arith.constant 0 : index
    %2 = vector.load %arg1[%c0_1, %c0_2] : memref<8x256xf32, #tpu.memory_space<vmem>>, vector<8x256xf32>
    tpu.vector_store %arg1[%c0_1, %c0_2], %1 {strides = array<i32>} : memref<8x256xf32, #tpu.memory_space<vmem>>, vector<8x256xf32>,
    return
  }
}

</mosaic_0001>

<llo_original>
// kernel: tpu_custom_call.1
$region0: #{tpu_custom_call.1}
  #allocation0 [shape = 'u32[]', space=smem, size = 0x4, offset = 0x4, fixed_abs, tag = 'smem constant byte address 0x4 - core index']
  #allocation1 [shape = 'u32[72,128]{1,0:T(1,128)}', space=vmem, size = 0x9000, scoped, tag = 'internal scratch']
  %s0 = inlined_call_operand.hbm [shape: f32[8,256], index: 0, kind: input, shape index: {}]
  %s1 = inlined_call_operand.hbm [shape: f32[8,256], index: 1, kind: output, shape index: {}]
  %s2 = sld [smem:[#allocation0]]
  $region18: #{tpu_custom_call.1} parent=0
    _
  %s4 = ssub.s32 1, %s2
  %s5 = scalar_select 0, %s4, %s2
  $region1: #{tpu_custom_call.1} parent=0
    #allocation2 [shape = 'u8[8192]{0}', space=vmem, size = 0x2000, scoped, tag = 'input window, operand 0, single buffered']
    #allocation3 [shape = 's32[1]{0}', space=sflag, size = 0x4, scoped, tag = 'scoped memory for tpu_custom_call.1']
    #allocation4 [shape = 's32[1]{0}', space=sflag, size = 0x4, scoped, tag = 'scoped memory for tpu_custom_call.1']
    #allocation5 [shape = 'u8[8192]{0}', space=vmem, size = 0x2000, scoped, tag = 'output window, operand 0, single buffered']
    %6 = vsyncpa [#allocation3], 0
    %7 = vsyncpa [#allocation4], 0
    // Predicated region
    $region2: #{tpu_custom_call.1} parent=1 // pred_check
      _
    $region3: #{tpu_custom_call.1} parent=1 // pred_check_branch
      %9 = sbr.rel (0) target = $region5
    $region4: #{tpu_custom_call.1} parent=1 // pred_region
      %11 = vsyncadd [#allocation3], 0
      %s13 = sshll.u32 %s0, 4
      %s14 = int_to_ptr.hbm [resolvable:$true] %s13
      %s15 = sshll.u32 [#allocation2], 4
      %s16 = int_to_ptr.vmem [resolvable:$true] %s15
      %18 = dma.hbm_to_vmem [thread:$0]  %s14, 256, %s16, [#allocation3]
    $region5: #{tpu_custom_call.1} parent=1 // pred_fallthru
      _
    // Predicated region
    $region6: #{tpu_custom_call.1} parent=1 // pred_check
      _
    $region7: #{tpu_custom_call.1} parent=1 // pred_check_branch
      %20 = sbr.rel (0) target = $region9
    $region8: #{tpu_custom_call.1} parent=1 // pred_region
      %22 = dma.done [#allocation3], 256
    $region9: #{tpu_custom_call.1} parent=1 // pred_fallthru
      _
    %v23 = vld [vmem:[#allocation2] sm:$0xff]
    %v24 = vld [vmem:[#allocation2 + $0x8] sm:$0xff]
    %25 = vrot.lane.b32.xlu0 %v23, 3
    %v26 = vpop.permute.xlu0 %25
    %27 = vrot.lane.b32.xlu0 %v24, 3
    %v28 = vpop.permute.xlu0 %27
    %v29 = vlaneseq
    %v30 = vand.u32 %v29, 127
    %vm31 = vcmp.lt.s32.totalorder %v30, 3
    %v32 = vsel %vm31, %v26, %v28
    %v33 = vsel %vm31, %v28, %v26
    %34 = vst [vmem:[#allocation5] sm:$0xff] %v33
    %35 = vst [vmem:[#allocation5 + $0x8] sm:$0xff] %v32
    // Predicated region
    $region10: #{tpu_custom_call.1} parent=1 // pred_check
      _
    $region11: #{tpu_custom_call.1} parent=1 // pred_check_branch
      %37 = sbr.rel (0) target = $region13
    $region12: #{tpu_custom_call.1} parent=1 // pred_region
      %39 = vsyncadd [#allocation4], 0
      %s41 = sshll.u32 [#allocation5], 4
      %s42 = int_to_ptr.vmem [resolvable:$true] %s41
      %s43 = sshll.u32 %s1, 4
      %s44 = int_to_ptr.hbm [resolvable:$true] %s43
      %46 = dma.vmem_to_hbm [thread:$0]  %s42, 256, %s44, [#allocation4]
    $region13: #{tpu_custom_call.1} parent=1 // pred_fallthru
      _
    // Predicated region
    $region14: #{tpu_custom_call.1} parent=1 // pred_check
      _
    $region15: #{tpu_custom_call.1} parent=1 // pred_check_branch
      %48 = sbr.rel (0) target = $region17
    $region16: #{tpu_custom_call.1} parent=1 // pred_region
      %50 = dma.done [#allocation4], 256
    $region17: #{tpu_custom_call.1} parent=1 // pred_fallthru
      _
    %51 = vsyncpa [#allocation3], 1
    %52 = vsyncpa [#allocation4], 1

</llo_original>
